<compile_context>
chip_gen: v5e
topology: v5e:2x2
jax: 0.10.0
libtpu: 0.0.40
codegen_flags: <defaults>
</compile_context>

<pallas_src>
import jax
import jax.numpy as jnp
from jax import lax
from jax.experimental import pallas as pl
from jax.experimental.pallas import tpu as pltpu

_SUBLANE = 8
_LANE = 128
_SLACK_BYTES = 4 * 1024 * 1024   # headroom for compiler scratch / layout padding


def _round_up(x, m):
    return (x + m - 1) // m * m


def _round_down(x, m):
    return x // m * m


def _vmem_budget_bytes():
    """Generation-aware VMEM budget (v7x: 64 MiB/TC; v5e/v6e: 128 MiB)."""
    try:
        cap = int(pltpu.get_tpu_info().vmem_capacity_bytes)
    except Exception:
        cap = 64 * 1024 * 1024   # info unavailable: assume the tightest chip (v7x)
    # ~48 MiB on v7x, ~96 MiB on v5e/v6e (per the perf-review targets).
    return max(16 * 1024 * 1024, min(cap * 3 // 4, cap - 16 * 1024 * 1024))


def _pick_tiles(batch, n_feature, budget, block_batch, block_feature):
    """Choose (batch tile tb, feature tile tf) so the full footprint fits VMEM.

    Footprint model (bytes):
        x        : 2 * tb * tf * 4          (double-buffered input tile)
        weight   : 2 * 8  * tf * 4          ((1, tf) block, sublane-padded, double-buffered)
        output   : 2 * 8  * tb * 4          (lane-dense (1, 1, tb) block, double-buffered)
        acc      :     8  * tb * 4          ((1, tb) f32 scratch, sublane-padded)
      => total = tb * (8*tf + 96) + 64*tf
    """
    avail = budget - _SLACK_BYTES

    def max_tb(tf):
        return (avail - 2 * _SUBLANE * tf * 4) // (8 * tf + 96)

    tb_need = max(_SUBLANE,
                  min(block_batch, _round_down(max(batch, _SUBLANE), _SUBLANE)))

    if block_feature is not None and block_feature < n_feature:
        tf = max(_LANE, _round_down(block_feature, _LANE))
    else:
        tf = n_feature
        if max_tb(tf) < min(tb_need, 256):
            # Feature axis too wide for a decent batch tile at full width:
            # tile the reduction axis too (accumulator path) and keep tb large.
            tb_target = min(tb_need, 512)
            tf = (avail - 96 * tb_target) // (8 * tb_target + 2 * _SUBLANE * 4)
            tf = max(_LANE, _round_down(min(tf, n_feature), _LANE))
    if tf >= n_feature:
        tf = n_feature

    tb = min(tb_need, max(_SUBLANE, max_tb(tf)))
    if tb >= _LANE:
        tb = _round_down(tb, _LANE)   # multiples of 128 -> unmasked lane-dense stores
    else:
        tb = _round_up(tb, _SUBLANE)
    return tb, tf


def _make_kernel(tb, tf, n_feature, lane_dense):
    masked_tail = (n_feature % tf) != 0   # ragged last feature tile (trace-time constant)

    def kernel(x_ref, w_ref, b_ref, o_ref, acc_ref):
        # x_ref: (tb, tf) VMEM; w_ref: (1, tf) VMEM; b_ref: (1, 1) SMEM;
        # o_ref: (1, 1, tb) or (tb, 1) VMEM; acc_ref: (1, tb) or (tb, 1) f32 VMEM.
        k = pl.program_id(1)

        @pl.when(k == 0)
        def _init():
            acc_ref[...] = jnp.zeros_like(acc_ref)

        xw = x_ref[...] * w_ref[...]                     # (tb, tf)  VPU multiply
        if masked_tail:
            # Zero the out-of-range feature lanes of the last (partial) F tile.
            col = k * tf + lax.broadcasted_iota(jnp.int32, xw.shape, 1)
            xw = jnp.where(col < n_feature, xw, 0.0)

        if lane_dense:
            # XLU lane reduction, then relayout the (tb,) row sums onto lanes so
            # the output store is a lane-dense unmasked vst (review's biggest lever).
            acc_ref[...] += jnp.sum(xw, axis=-1)[None, :]          # (1, tb)
        else:
            acc_ref[...] += jnp.sum(xw, axis=-1, keepdims=True)    # (tb, 1)

        @pl.when(k == pl.num_programs(1) - 1)
        def _finalize():
            y = acc_ref[...] + b_ref[0, 0]               # scalar bias from SMEM
            if lane_dense:
                o_ref[...] = y[None].astype(o_ref.dtype)            # (1, 1, tb)
            else:
                o_ref[...] = y.astype(o_ref.dtype)                  # (tb, 1)

    return kernel


def _call_pallas(x, weight, bias2d, tb, tf, budget, lane_dense):
    batch, n_feature = x.shape
    num_tiles = pl.cdiv(batch, tb)
    num_f = pl.cdiv(n_feature, tf)

    if lane_dense:
        out_shape = jax.ShapeDtypeStruct((num_tiles, 1, tb), jnp.float32)
        out_spec = pl.BlockSpec((1, 1, tb), lambda i, k: (i, 0, 0))
        acc = pltpu.VMEM((1, tb), jnp.float32)
    else:
        out_shape = jax.ShapeDtypeStruct((num_tiles * tb, 1), jnp.float32)
        out_spec = pl.BlockSpec((tb, 1), lambda i, k: (i, 0))
        acc = pltpu.VMEM((tb, 1), jnp.float32)

    out = pl.pallas_call(
        _make_kernel(tb, tf, n_feature, lane_dense),
        out_shape=out_shape,
        grid_spec=pltpu.PrefetchScalarGridSpec(
            num_scalar_prefetch=0,
            grid=(num_tiles, num_f),                  # reduction (feature) axis last
            in_specs=[
                # x: one (tb, tf) tile per step (streamed, double-buffered by Pallas).
                pl.BlockSpec((tb, tf), lambda i, k: (i, k)),
                # weight: tiny block, constant across the batch axis.
                # NOTE: pl.Buffered(1) would halve its footprint; kept at the default
                # and simply accounted for in the VMEM budget instead.
                pl.BlockSpec((1, tf), lambda i, k: (0, k)),
                # bias: scalar in SMEM (no VMEM double-buffer for 4 bytes).
                pl.BlockSpec(memory_space=pltpu.MemorySpace.SMEM),
            ],
            out_specs=out_spec,
            scratch_shapes=[acc],
        ),
        compiler_params=pltpu.CompilerParams(
            # TODO(synk): confirm with an xprof trace that the batch axis actually
            # splits across v7x's two TensorCores; if not, switch this axis to
            # pltpu.CORE_PARALLEL or add an explicit leading core axis.
            dimension_semantics=("parallel", "arbitrary"),
            vmem_limit_bytes=int(budget),
        ),
    )(x, weight, bias2d)

    return out.reshape(num_tiles * tb, 1)


def linear_net_forward(x, weight, bias, *, block_batch=1024, block_feature=None,
                       allow_xla_fallback=False):
    """Pallas implementation of LinearNet.forward: y = x @ weight.T + bias."""
    batch, n_feature = x.shape
    assert weight.shape == (1, n_feature)
    assert bias.shape == (1,)

    x = x.astype(jnp.float32)
    weight = weight.astype(jnp.float32)
    bias = bias.astype(jnp.float32)

    # For truly tiny problems (e.g. the classic 2-feature regression) each vreg /
    # VMEM tile is ~98% padding and launch overhead dominates; optionally punt to
    # plain XLA.  Off by default so the Pallas kernel is always exercised here.
    if allow_xla_fallback and (n_feature < 16 or batch < _SUBLANE):
        return x @ weight.T + bias

    bias2d = bias.reshape(1, 1)

    orig_batch = batch
    if batch < _SUBLANE:
        # Degenerate batch: pad the handful of rows up to one sublane (tiny copy).
        x = jnp.pad(x, ((0, _SUBLANE - batch), (0, 0)))
        batch = _SUBLANE

    budget = _vmem_budget_bytes()
    tb, tf = _pick_tiles(batch, n_feature, budget, block_batch, block_feature)

    try:
        out = _call_pallas(x, weight, bias2d, tb, tf, budget, lane_dense=True)
    except Exception:
        # Safety net: if this Mosaic version rejects the sublane->lane relayout of
        # the row sums, fall back to the row-major (tb, 1) store (always supported).
        out = _call_pallas(x, weight, bias2d, tb, tf, budget, lane_dense=False)

    return out[:orig_batch]


if __name__ == "__main__":
    root = jax.random.PRNGKey(0)

    def _reference(x, w, b):
        return x @ w.T + b

    def _check(case_idx, batch, n_feature, **kwargs):
        kx, kw, kb = jax.random.split(jax.random.fold_in(root, case_idx), 3)
        x = jax.random.normal(kx, (batch, n_feature), dtype=jnp.float32)
        w = jax.random.normal(kw, (1, n_feature), dtype=jnp.float32) * 0.01
        b = jax.random.normal(kb, (1,), dtype=jnp.float32) * 0.01
        y = linear_net_forward(x, w, b, **kwargs)
        jax.block_until_ready(y)
        y_ref = _reference(x, w, b)
        assert y.shape == (batch, 1), (y.shape, batch)
        assert jnp.allclose(y, y_ref, atol=1e-5, rtol=1e-5), (batch, n_feature)

    # Classic linear-regression sizes (matches the PyTorch example: 2 features).
    _check(0, batch=8, n_feature=2)
    # Ragged last batch tile + 128-row lane-dense tiles (no padding copy of x).
    _check(1, batch=200, n_feature=384)
    # Forced feature-axis tiling: exercises the accumulator + ragged-feature mask.
    _check(2, batch=64, n_feature=320, block_feature=128)

    print("KERNEL_OK")
</pallas_src>

<mosaic_0001>
module attributes {stable_mosaic.version = 11 : i64} {
  func.func @kernel(%arg0: i32, %arg1: i32, %arg2: memref<8x2xf32, #tpu.memory_space<vmem>>, %arg3: memref<1x2xf32, #tpu.memory_space<vmem>>, %arg4: memref<1x1xf32, #tpu.memory_space<smem>>, %arg5: memref<1x1x8xf32, #tpu.memory_space<vmem>>, %arg6: memref<1x8xf32, #tpu.memory_space<vmem>>) attributes {dimension_semantics = [#tpu.dimension_semantics<parallel>, #tpu.dimension_semantics<arbitrary>], iteration_bounds = array<i64: 1, 1>, scalar_prefetch = 0 : i64, scratch_operands = 1 : i64, tpu.core_type = #tpu.core_type<tc>, window_params = [{transform_indices = @transform_0, window_bounds = array<i64: 8, 2>}, {transform_indices = @transform_1, window_bounds = array<i64: 1, 2>}, {transform_indices = @transform_2, window_bounds = array<i64: 1, 1>}, {transform_indices = @transform_3, window_bounds = array<i64: 1, 1, 8>}]} {
    %c0_i32 = arith.constant 0 : i32
    %0 = arith.cmpi eq, %arg1, %c0_i32 : i32
    %1 = arith.extui %0 : i1 to i32
    %c0_i32_0 = arith.constant 0 : i32
    %2 = arith.cmpi ne, %1, %c0_i32_0 : i32
    scf.if %2 {
      %cst_10 = arith.constant 0.000000e+00 : f32
      %15 = vector.broadcast %cst_10 : f32 to vector<1x8xf32>
      %c0_11 = arith.constant 0 : index
      %c0_12 = arith.constant 0 : index
      %16 = vector.load %arg6[%c0_11, %c0_12] : memref<1x8xf32, #tpu.memory_space<vmem>>, vector<1x8xf32>
      tpu.vector_store %arg6[%c0_11, %c0_12], %15 {strides = array<i32>} : memref<1x8xf32, #tpu.memory_space<vmem>>, vector<1x8xf32>,
    } else {
    }
    %c0 = arith.constant 0 : index
    %c0_1 = arith.constant 0 : index
    %3 = vector.load %arg2[%c0, %c0_1] : memref<8x2xf32, #tpu.memory_space<vmem>>, vector<8x2xf32>
    %c0_2 = arith.constant 0 : index
    %c0_3 = arith.constant 0 : index
    %4 = vector.load %arg3[%c0_2, %c0_3] : memref<1x2xf32, #tpu.memory_space<vmem>>, vector<1x2xf32>
    %5 = vector.broadcast %4 : vector<1x2xf32> to vector<8x2xf32>
    %6 = arith.mulf %3, %5 : vector<8x2xf32>
    %c0_4 = arith.constant 0 : index
    %c0_5 = arith.constant 0 : index
    %7 = vector.load %arg6[%c0_4, %c0_5] : memref<1x8xf32, #tpu.memory_space<vmem>>, vector<1x8xf32>
    %cst = arith.constant dense<0.000000e+00> : vector<8xf32>
    %8 = vector.multi_reduction <add>, %6, %cst [1] : vector<8x2xf32> to vector<8xf32>
    %9 = vector.shape_cast %8 : vector<8xf32> to vector<1x8xf32>
    %10 = arith.addf %7, %9 : vector<1x8xf32>
    %c0_6 = arith.constant 0 : index
    %c0_7 = arith.constant 0 : index
    %11 = vector.load %arg6[%c0_6, %c0_7] : memref<1x8xf32, #tpu.memory_space<vmem>>, vector<1x8xf32>
    tpu.vector_store %arg6[%c0_6, %c0_7], %10 {strides = array<i32>} : memref<1x8xf32, #tpu.memory_space<vmem>>, vector<1x8xf32>,
    %c0_i32_8 = arith.constant 0 : i32
    %12 = arith.cmpi eq, %arg1, %c0_i32_8 : i32
    %13 = arith.extui %12 : i1 to i32
    %c0_i32_9 = arith.constant 0 : i32
    %14 = arith.cmpi ne, %13, %c0_i32_9 : i32
    scf.if %14 {
      %c0_10 = arith.constant 0 : index
      %c0_11 = arith.constant 0 : index
      %15 = vector.load %arg6[%c0_10, %c0_11] : memref<1x8xf32, #tpu.memory_space<vmem>>, vector<1x8xf32>
      %c0_12 = arith.constant 0 : index
      %c0_13 = arith.constant 0 : index
      %16 = memref.load %arg4[%c0_12, %c0_13] : memref<1x1xf32, #tpu.memory_space<smem>>
      %17 = vector.broadcast %16 : f32 to vector<1x8xf32>
      %18 = arith.addf %15, %17 : vector<1x8xf32>
      %19 = vector.shape_cast %18 : vector<1x8xf32> to vector<1x1x8xf32>
      %c0_14 = arith.constant 0 : index
      %c0_15 = arith.constant 0 : index
      %c0_16 = arith.constant 0 : index
      %20 = vector.load %arg5[%c0_14, %c0_15, %c0_16] : memref<1x1x8xf32, #tpu.memory_space<vmem>>, vector<1x1x8xf32>
      tpu.vector_store %arg5[%c0_14, %c0_15, %c0_16], %19 {strides = array<i32>} : memref<1x1x8xf32, #tpu.memory_space<vmem>>, vector<1x1x8xf32>,
    } else {
    }
    return
  }
  func.func @transform_0(%arg0: i32, %arg1: i32) -> (i32, i32) {
    %c0_i32 = arith.constant 0 : i32
    return %arg0, %arg1 : i32, i32
  }
  func.func @transform_1(%arg0: i32, %arg1: i32) -> (i32, i32) {
    %c0_i32 = arith.constant 0 : i32
    %c0_i32_0 = arith.constant 0 : i32
    return %c0_i32, %arg1 : i32, i32
  }
  func.func @transform_2(%arg0: i32, %arg1: i32) -> (i32, i32) {
    %c0_i32 = arith.constant 0 : i32
    %c0_i32_0 = arith.constant 0 : i32
    %c0_i32_1 = arith.constant 0 : i32
    return %c0_i32, %c0_i32_0 : i32, i32
  }
  func.func @transform_3(%arg0: i32, %arg1: i32) -> (i32, i32, i32) {
    %c0_i32 = arith.constant 0 : i32
    %c0_i32_0 = arith.constant 0 : i32
    %c0_i32_1 = arith.constant 0 : i32
    return %arg0, %c0_i32, %c0_i32_0 : i32, i32, i32
  }
}

module attributes {stable_mosaic.version = 11 : i64} {
  func.func @kernel(%arg0: i32, %arg1: i32, %arg2: memref<8x2xf32, #tpu.memory_space<vmem>>, %arg3: memref<1x2xf32, #tpu.memory_space<vmem>>, %arg4: memref<1x1xf32, #tpu.memory_space<smem>>, %arg5: memref<8x1xf32, #tpu.memory_space<vmem>>, %arg6: memref<8x1xf32, #tpu.memory_space<vmem>>) attributes {dimension_semantics = [#tpu.dimension_semantics<parallel>, #tpu.dimension_semantics<arbitrary>], iteration_bounds = array<i64: 1, 1>, scalar_prefetch = 0 : i64, scratch_operands = 1 : i64, tpu.core_type = #tpu.core_type<tc>, window_params = [{transform_indices = @transform_0, window_bounds = array<i64: 8, 2>}, {transform_indices = @transform_1, window_bounds = array<i64: 1, 2>}, {transform_indices = @transform_2, window_bounds = array<i64: 1, 1>}, {transform_indices = @transform_3, window_bounds = array<i64: 8, 1>}]} {
    %c0_i32 = arith.constant 0 : i32
    %0 = arith.cmpi eq, %arg1, %c0_i32 : i32
    %1 = arith.extui %0 : i1 to i32
    %c0_i32_0 = arith.constant 0 : i32
    %2 = arith.cmpi ne, %1, %c0_i32_0 : i32
    scf.if %2 {
      %cst_10 = arith.constant 0.000000e+00 : f32
      %15 = vector.broadcast %cst_10 : f32 to vector<8x1xf32>
      %c0_11 = arith.constant 0 : index
      %c0_12 = arith.constant 0 : index
      %16 = vector.load %arg6[%c0_11, %c0_12] : memref<8x1xf32, #tpu.memory_space<vmem>>, vector<8x1xf32>
      tpu.vector_store %arg6[%c0_11, %c0_12], %15 {strides = array<i32>} : memref<8x1xf32, #tpu.memory_space<vmem>>, vector<8x1xf32>,
    } else {
    }
    %c0 = arith.constant 0 : index
    %c0_1 = arith.constant 0 : index
    %3 = vector.load %arg2[%c0, %c0_1] : memref<8x2xf32, #tpu.memory_space<vmem>>, vector<8x2xf32>
    %c0_2 = arith.constant 0 : index
    %c0_3 = arith.constant 0 : index
    %4 = vector.load %arg3[%c0_2, %c0_3] : memref<1x2xf32, #tpu.memory_space<vmem>>, vector<1x2xf32>
    %5 = vector.broadcast %4 : vector<1x2xf32> to vector<8x2xf32>
    %6 = arith.mulf %3, %5 : vector<8x2xf32>
    %c0_4 = arith.constant 0 : index
    %c0_5 = arith.constant 0 : index
    %7 = vector.load %arg6[%c0_4, %c0_5] : memref<8x1xf32, #tpu.memory_space<vmem>>, vector<8x1xf32>
    %cst = arith.constant dense<0.000000e+00> : vector<8xf32>
    %8 = vector.multi_reduction <add>, %6, %cst [1] : vector<8x2xf32> to vector<8xf32>
    %9 = vector.shape_cast %8 : vector<8xf32> to vector<8x1xf32>
    %10 = arith.addf %7, %9 : vector<8x1xf32>
    %c0_6 = arith.constant 0 : index
    %c0_7 = arith.constant 0 : index
    %11 = vector.load %arg6[%c0_6, %c0_7] : memref<8x1xf32, #tpu.memory_space<vmem>>, vector<8x1xf32>
    tpu.vector_store %arg6[%c0_6, %c0_7], %10 {strides = array<i32>} : memref<8x1xf32, #tpu.memory_space<vmem>>, vector<8x1xf32>,
    %c0_i32_8 = arith.constant 0 : i32
    %12 = arith.cmpi eq, %arg1, %c0_i32_8 : i32
    %13 = arith.extui %12 : i1 to i32
    %c0_i32_9 = arith.constant 0 : i32
    %14 = arith.cmpi ne, %13, %c0_i32_9 : i32
    scf.if %14 {
      %c0_10 = arith.constant 0 : index
      %c0_11 = arith.constant 0 : index
      %15 = vector.load %arg6[%c0_10, %c0_11] : memref<8x1xf32, #tpu.memory_space<vmem>>, vector<8x1xf32>
      %c0_12 = arith.constant 0 : index
      %c0_13 = arith.constant 0 : index
      %16 = memref.load %arg4[%c0_12, %c0_13] : memref<1x1xf32, #tpu.memory_space<smem>>
      %17 = vector.broadcast %16 : f32 to vector<8x1xf32>
      %18 = arith.addf %15, %17 : vector<8x1xf32>
      %c0_14 = arith.constant 0 : index
      %c0_15 = arith.constant 0 : index
      %19 = vector.load %arg5[%c0_14, %c0_15] : memref<8x1xf32, #tpu.memory_space<vmem>>, vector<8x1xf32>
      tpu.vector_store %arg5[%c0_14, %c0_15], %18 {strides = array<i32>} : memref<8x1xf32, #tpu.memory_space<vmem>>, vector<8x1xf32>,
    } else {
    }
    return
  }
  func.func @transform_0(%arg0: i32, %arg1: i32) -> (i32, i32) {
    %c0_i32 = arith.constant 0 : i32
    return %arg0, %arg1 : i32, i32
  }
  func.func @transform_1(%arg0: i32, %arg1: i32) -> (i32, i32) {
    %c0_i32 = arith.constant 0 : i32
    %c0_i32_0 = arith.constant 0 : i32
    return %c0_i32, %arg1 : i32, i32
  }
  func.func @transform_2(%arg0: i32, %arg1: i32) -> (i32, i32) {
    %c0_i32 = arith.constant 0 : i32
    %c0_i32_0 = arith.constant 0 : i32
    %c0_i32_1 = arith.constant 0 : i32
    return %c0_i32, %c0_i32_0 : i32, i32
  }
  func.func @transform_3(%arg0: i32, %arg1: i32) -> (i32, i32) {
    %c0_i32 = arith.constant 0 : i32
    %c0_i32_0 = arith.constant 0 : i32
    return %arg0, %c0_i32 : i32, i32
  }
}

</mosaic_0001>

<llo_original>
// kernel: tpu_custom_call.1
$region0: #{tpu_custom_call.1}
  #allocation0 [shape = 'u32[]', space=smem, size = 0x4, offset = 0x4, fixed_abs, tag = 'smem constant byte address 0x4 - core index']
  #allocation1 [shape = 'u32[72,128]{1,0:T(1,128)}', space=vmem, size = 0x9000, scoped, tag = 'internal scratch']
  #allocation2 [shape = 'f32[1,8]{1,0:T(1,128)}', space=vmem, size = 0x200, scoped, tag = 'scratch operand']
  #allocation3 [shape = 'f32[1,1]{1,0:T(1,128)S(6)}', space=smem, size = 0x200, scoped, tag = 'scoped memory for tpu_custom_call.1']
  %s0 = inlined_call_operand.vmem [shape: f32[8,2], index: 0, kind: input, shape index: {}]
  %s1 = inlined_call_operand.vmem [shape: f32[1,2], index: 1, kind: input, shape index: {}]
  %s2 = inlined_call_operand.<no memory space> [shape: f32[1,1], index: 2, kind: input, shape index: {}]
  %s3 = inlined_call_operand.hbm [shape: f32[1,1,8], index: 3, kind: output, shape index: {}]
  %s4 = sld [smem:[#allocation0]]
  $region30: #{tpu_custom_call.1} parent=0
    _
  %s6 = ssub.s32 1, %s4
  %s7 = scalar_select 0, %s6, %s4
  %8 = sst [smem:[#allocation3]] %s2
  $region1: #{tpu_custom_call.1} parent=0
    #allocation4 [shape = 'u8[512]{0}', space=vmem, size = 0x400, scoped, tag = 'output window, operand 0, single buffered']
    #allocation5 [shape = 's32[1]{0}', space=sflag, size = 0x4, scoped, tag = 'scoped memory for tpu_custom_call.1']
    %9 = vsyncpa [#allocation5], 0
    // Predicated region
    $region2: #{tpu_custom_call.1} parent=1 // pred_check
      _
    $region3: #{tpu_custom_call.1} parent=1 // pred_check_branch
      %11 = sbr.rel (0) target = $region5
    $region4: #{tpu_custom_call.1} parent=1 // pred_region
      _
    $region5: #{tpu_custom_call.1} parent=1 // pred_fallthru
      _
    // Predicated region
    $region6: #{tpu_custom_call.1} parent=1 // pred_check
      _
    $region7: #{tpu_custom_call.1} parent=1 // pred_check_branch
      %13 = sbr.rel (0) target = $region9
    $region8: #{tpu_custom_call.1} parent=1 // pred_region
      _
    $region9: #{tpu_custom_call.1} parent=1 // pred_fallthru
      _
    // Predicated region
    $region10: #{tpu_custom_call.1} parent=1 // pred_check
      _
    $region11: #{tpu_custom_call.1} parent=1 // pred_check_branch
      %15 = sbr.rel (0) target = $region13
    $region12: #{tpu_custom_call.1} parent=1 // pred_region
      _
    $region13: #{tpu_custom_call.1} parent=1 // pred_fallthru
      _
    %p16 = scmp.eq.s32.totalorder 0, 0
    // Predicated region
    $region14: #{tpu_custom_call.1} parent=1 // pred_check
      %p17 = pneg %p16
    $region15: #{tpu_custom_call.1} parent=1 // pred_check_branch
      %19 = sbr.rel (%p17) target = $region17
    $region16: #{tpu_custom_call.1} parent=1 // pred_region
      %vm20 = vcmask 57344
      %21 = vst.msk [vmem:[#allocation2] sm:$0x1] %vm20, 0.0
    $region17: #{tpu_custom_call.1} parent=1 // pred_fallthru
      _
    %v22 = vld [vmem:[%s0] sm:$0xff]
    %v23 = vld [vmem:[%s1] sm:$0x1]
    %v25 = vperm.slane %v23, 0
    %v27 = vmul.f32 %v22, %v25
    %v28 = vld [vmem:[#allocation2] sm:$0x1]
    %vm29 = vcmask 15360
    %v30 = vsel %vm29, %v27, 0.0
    %31 = vadd.xlane.f32.xlu0 %v30
    %v32 = vpop.xlane.xlu0 %31
    %v34 = vperm.slane %v32, 0
    %v35 = vperm.slane %v32, 1
    %v36 = vperm.slane %v32, 2
    %v37 = vperm.slane %v32, 3
    %v38 = vperm.slane %v32, 4
    %v39 = vperm.slane %v32, 5
    %v40 = vperm.slane %v32, 6
    %v41 = vperm.slane %v32, 7
    %42 = vst [vmem:[#allocation1] ss:$9 sm:$0xff] %v34
    %s43 = scalar_lea.vmem [#allocation1], 1
    %44 = vst [vmem:[%s43] ss:$9 sm:$0xff] %v35
    %s45 = scalar_lea.vmem [#allocation1], 2
    %46 = vst [vmem:[%s45] ss:$9 sm:$0xff] %v36
    %s47 = scalar_lea.vmem [#allocation1], 3
    %48 = vst [vmem:[%s47] ss:$9 sm:$0xff] %v37
    %s49 = scalar_lea.vmem [#allocation1], 4
    %50 = vst [vmem:[%s49] ss:$9 sm:$0xff] %v38
    %s51 = scalar_lea.vmem [#allocation1], 5
    %52 = vst [vmem:[%s51] ss:$9 sm:$0xff] %v39
    %s53 = scalar_lea.vmem [#allocation1], 6
    %54 = vst [vmem:[%s53] ss:$9 sm:$0xff] %v40
    %s55 = scalar_lea.vmem [#allocation1], 7
    %56 = vst [vmem:[%s55] ss:$9 sm:$0xff] %v41
    %v57 = vld [vmem:[#allocation1] sm:$0xff]
    %58 = vset.pattern.permute.xlu0 0
    %59 = vperm.xlu0 %58, %v57
    %v60 = vpop.permute.xlu0 %59
    %v61 = vlaneseq
    %v62 = vand.u32 %v61, 127
    %v63 = vperm.slane %v60, %v62
    %v65 = vadd.f32 %v28, %v63
    %vm66 = vcmask 57344
    %67 = vst.msk [vmem:[#allocation2] sm:$0x1] %vm66, %v65
    // Predicated region
    $region18: #{tpu_custom_call.1} parent=1 // pred_check
      %p68 = pneg %p16
    $region19: #{tpu_custom_call.1} parent=1 // pred_check_branch
      %70 = sbr.rel (%p68) target = $region21
    $region20: #{tpu_custom_call.1} parent=1 // pred_region
      %v71 = vld [vmem:[#allocation2] sm:$0x1]
      %s72 = sld [smem:[#allocation3]]
      %v73 = vstv %s72
      %v74 = vadd.f32 %v71, %v73
      %75 = vst.msk [vmem:[#allocation4] sm:$0x1] %vm66, %v74
    $region21: #{tpu_custom_call.1} parent=1 // pred_fallthru
      _
    // Predicated region
    $region22: #{tpu_custom_call.1} parent=1 // pred_check
      _
    $region23: #{tpu_custom_call.1} parent=1 // pred_check_branch
      %77 = sbr.rel (0) target = $region25
    $region24: #{tpu_custom_call.1} parent=1 // pred_region
      %79 = vsyncadd [#allocation5], 0
      %s81 = sshll.u32 [#allocation4], 4
      %s82 = int_to_ptr.vmem [resolvable:$true] %s81
      %s83 = sshll.u32 %s3, 4
      %s84 = int_to_ptr.hbm [resolvable:$true] %s83
      %86 = dma.vmem_to_hbm [thread:$0]  %s82, 16, %s84, [#allocation5]
    $region25: #{tpu_custom_call.1} parent=1 // pred_fallthru
      _
    // Predicated region
    $region26: #{tpu_custom_call.1} parent=1 // pred_check
      _
    $region27: #{tpu_custom_call.1} parent=1 // pred_check_branch
      %88 = sbr.rel (0) target = $region29
    $region28: #{tpu_custom_call.1} parent=1 // pred_region
      %90 = dma.done [#allocation5], 16
    $region29: #{tpu_custom_call.1} parent=1 // pred_fallthru
      _
    %91 = vsyncpa [#allocation5], 1

// kernel: tpu_custom_call.1
$region0: #{tpu_custom_call.1}
  #allocation0 [shape = 'u32[]', space=smem, size = 0x4, offset = 0x4, fixed_abs, tag = 'smem constant byte address 0x4 - core index']
  #allocation1 [shape = 'u32[72,128]{1,0:T(1,128)}', space=vmem, size = 0x9000, scoped, tag = 'internal scratch']
  #allocation2 [shape = 'f32[8,1]{1,0:T(8,128)}', space=vmem, size = 0x1000, scoped, tag = 'scratch operand']
  #allocation3 [shape = 'f32[1,1]{1,0:T(1,128)S(6)}', space=smem, size = 0x200, scoped, tag = 'scoped memory for tpu_custom_call.1']
  %s0 = inlined_call_operand.vmem [shape: f32[8,2], index: 0, kind: input, shape index: {}]
  %s1 = inlined_call_operand.vmem [shape: f32[1,2], index: 1, kind: input, shape index: {}]
  %s2 = inlined_call_operand.<no memory space> [shape: f32[1,1], index: 2, kind: input, shape index: {}]
  %s3 = inlined_call_operand.vmem [shape: f32[8,1], index: 3, kind: output, shape index: {}]
  %s4 = sld [smem:[#allocation0]]
  $region30: #{tpu_custom_call.1} parent=0
    _
  %s6 = ssub.s32 1, %s4
  %s7 = scalar_select 0, %s6, %s4
  %8 = sst [smem:[#allocation3]] %s2
  // Predicated region
  $region2: #{tpu_custom_call.1} parent=0 // pred_check
    _
  $region3: #{tpu_custom_call.1} parent=0 // pred_check_branch
    %10 = sbr.rel (0) target = $region5
  $region4: #{tpu_custom_call.1} parent=0 // pred_region
    _
  $region5: #{tpu_custom_call.1} parent=0 // pred_fallthru
    _
  // Predicated region
  $region6: #{tpu_custom_call.1} parent=0 // pred_check
    _
  $region7: #{tpu_custom_call.1} parent=0 // pred_check_branch
    %12 = sbr.rel (0) target = $region9
  $region8: #{tpu_custom_call.1} parent=0 // pred_region
    _
  $region9: #{tpu_custom_call.1} parent=0 // pred_fallthru
    _
  // Predicated region
  $region10: #{tpu_custom_call.1} parent=0 // pred_check
    _
  $region11: #{tpu_custom_call.1} parent=0 // pred_check_branch
    %14 = sbr.rel (0) target = $region13
  $region12: #{tpu_custom_call.1} parent=0 // pred_region
    _
  $region13: #{tpu_custom_call.1} parent=0 // pred_fallthru
    _
  %p15 = scmp.eq.s32.totalorder 0, 0
  // Predicated region
  $region14: #{tpu_custom_call.1} parent=0 // pred_check
    %p16 = pneg %p15
  $region15: #{tpu_custom_call.1} parent=0 // pred_check_branch
    %18 = sbr.rel (%p16) target = $region17
  $region16: #{tpu_custom_call.1} parent=0 // pred_region
    %vm19 = vcmask 7168
    %20 = vst.msk [vmem:[#allocation2] sm:$0xff] %vm19, 0.0
  $region17: #{tpu_custom_call.1} parent=0 // pred_fallthru
    _
  %v21 = vld [vmem:[%s0] sm:$0xff]
  %v22 = vld [vmem:[%s1] sm:$0x1]
  %v24 = vperm.slane %v22, 0
  %v26 = vmul.f32 %v21, %v24
  %v27 = vld [vmem:[#allocation2] sm:$0xff]
  %vm28 = vcmask 15360
  %v29 = vsel %vm28, %v26, 0.0
  %30 = vadd.xlane.f32.xlu0 %v29
  %v31 = vpop.xlane.xlu0 %30
  %v32 = vadd.f32 %v27, %v31
  %vm33 = vcmask 7168
  %34 = vst.msk [vmem:[#allocation2] sm:$0xff] %vm33, %v32
  // Predicated region
  $region18: #{tpu_custom_call.1} parent=0 // pred_check
    %p35 = pneg %p15
  $region19: #{tpu_custom_call.1} parent=0 // pred_check_branch
    %37 = sbr.rel (%p35) target = $region21
  $region20: #{tpu_custom_call.1} parent=0 // pred_region
    %v38 = vld [vmem:[#allocation2] sm:$0xff]
    %s39 = sld [smem:[#allocation3]]
    %v40 = vstv %s39
    %v41 = vadd.f32 %v38, %v40
    %42 = vst.msk [vmem:[%s3] sm:$0xff] %vm33, %v41
  $region21: #{tpu_custom_call.1} parent=0 // pred_fallthru
    _
  // Predicated region
  $region22: #{tpu_custom_call.1} parent=0 // pred_check
    _
  $region23: #{tpu_custom_call.1} parent=0 // pred_check_branch
    %44 = sbr.rel (0) target = $region25
  $region24: #{tpu_custom_call.1} parent=0 // pred_region
    _
  $region25: #{tpu_custom_call.1} parent=0 // pred_fallthru
    _
  // Predicated region
  $region26: #{tpu_custom_call.1} parent=0 // pred_check
    _
  $region27: #{tpu_custom_call.1} parent=0 // pred_check_branch
    %46 = sbr.rel (0) target = $region29
  $region28: #{tpu_custom_call.1} parent=0 // pred_region
    _
  $region29: #{tpu_custom_call.1} parent=0 // pred_fallthru
    _

</llo_original>
